<compile_context>
chip_gen: v7x
topology: tpu7x:2x2x1
jax: 0.10.0
libtpu: 0.0.40
codegen_flags: <defaults>
</compile_context>

<pallas_src>
import jax
import jax.numpy as jnp
from jax.experimental import pallas as pl
from jax.experimental.pallas import tpu as pltpu


# ----------------------------------------------------------------------------
# Path 1: zero-copy identity (output aliases input; no data movement).
# ----------------------------------------------------------------------------
def _alias_noop_kernel(x_hbm_ref, o_hbm_ref, flag_ref):
    # Output buffer aliases the input buffer, so the identity needs no data
    # movement.  Write one SMEM scalar so the kernel body is non-empty.
    del x_hbm_ref, o_hbm_ref
    flag_ref[0] = jnp.int32(1)


def nonlin_rem_forward(data: jax.Array) -> jax.Array:
    """Identity forward of NonlinRem with zero HBM traffic (aliased output)."""
    return pl.pallas_call(
        _alias_noop_kernel,
        out_shape=jax.ShapeDtypeStruct(data.shape, data.dtype),
        in_specs=[pl.BlockSpec(memory_space=pl.ANY)],   # raw HBM ref, no auto-DMA
        out_specs=pl.BlockSpec(memory_space=pl.ANY),    # raw HBM ref, no auto-DMA
        scratch_shapes=[pltpu.SMEM((1,), jnp.int32)],
        input_output_aliases={0: 0},
    )(data)


# ----------------------------------------------------------------------------
# Path 2: explicit materializing copy via direct HBM->HBM DMA (no VMEM).
# ----------------------------------------------------------------------------
def _make_dma_copy_kernel(chunk_bounds):
    """chunk_bounds: list of (start, size) static slices along axis 0, or
    [None] meaning 'copy the whole ref in one DMA'."""

    def kernel(x_hbm_ref, o_hbm_ref, sems):
        copies = []
        if chunk_bounds == [None]:
            copies.append(pltpu.make_async_copy(x_hbm_ref, o_hbm_ref, sems.at[0]))
        else:
            for idx, (lo, sz) in enumerate(chunk_bounds):
                copies.append(
                    pltpu.make_async_copy(
                        x_hbm_ref.at[pl.ds(lo, sz)],
                        o_hbm_ref.at[pl.ds(lo, sz)],
                        sems.at[idx],
                    )
                )
        # Issue all DMAs first (keeps several DMA engines busy on big copies),
        # then wait for all of them.
        for cp in copies:
            cp.start()
        for cp in copies:
            cp.wait()

    return kernel


def nonlin_rem_forward_copy(data: jax.Array) -> jax.Array:
    """Identity forward that materializes a fresh output buffer.

    Implemented as a direct HBM->HBM DMA: no VMEM staging, no lane/sublane
    tiling constraints, no wrapper-side reshapes (so no XLA relayout copies),
    and it should track the HBM read+write roofline on v5e/v6e/v7x.
    """
    if data.size == 0:
        return data  # nothing to copy

    itemsize = jnp.dtype(data.dtype).itemsize
    total_bytes = int(data.size) * itemsize

    # Split large copies into a few concurrent DMAs along the leading axis so
    # more than one DMA engine can be in flight; small copies use one DMA.
    if data.ndim >= 1 and data.shape[0] >= 2 and total_bytes >= (4 << 20):
        num_chunks = min(4, int(data.shape[0]))
        lead = int(data.shape[0])
        base, rem = divmod(lead, num_chunks)
        chunk_bounds = []
        start = 0
        for c in range(num_chunks):
            sz = base + (1 if c < rem else 0)
            chunk_bounds.append((start, sz))
            start += sz
    else:
        num_chunks = 1
        chunk_bounds = [None]

    return pl.pallas_call(
        _make_dma_copy_kernel(chunk_bounds),
        out_shape=jax.ShapeDtypeStruct(data.shape, data.dtype),
        in_specs=[pl.BlockSpec(memory_space=pl.ANY)],   # raw HBM ref
        out_specs=pl.BlockSpec(memory_space=pl.ANY),    # raw HBM ref
        scratch_shapes=[pltpu.SemaphoreType.DMA((num_chunks,))],
        cost_estimate=pl.CostEstimate(
            flops=0, transcendentals=0, bytes_accessed=2 * total_bytes
        ),
    )(data)


# ----------------------------------------------------------------------------
# Self-test.
# ----------------------------------------------------------------------------
if __name__ == "__main__":
    key = jax.random.PRNGKey(0)
    shape = (2, 4, 16, 16)  # NCHW: batch=2, channels=4, 16x16 spatial

    # --- zero-copy aliased path (donate the input so the alias is realized
    #     without any hidden copy or donation warning) ---
    x = jax.random.normal(key, shape, dtype=jnp.float32)
    x_host = jax.device_get(x)  # host reference copy for verification
    fwd = jax.jit(nonlin_rem_forward, donate_argnums=0)
    y = fwd(x)
    jax.block_until_ready(y)
    assert y.shape == x_host.shape and y.dtype == jnp.float32
    assert (jax.device_get(y) == x_host).all()

    # --- explicit copy path (HBM->HBM DMA), standard shape ---
    x2 = jax.random.normal(key, shape, dtype=jnp.float32)
    y2 = nonlin_rem_forward_copy(x2)
    jax.block_until_ready(y2)
    assert y2.shape == x2.shape and y2.dtype == x2.dtype
    assert bool(jnp.all(y2 == x2))

    # --- explicit copy path, awkward shape / dtype (DMA path is layout-
    #     agnostic: no 128-lane or multiple-of-8 requirement) ---
    x3 = jax.random.normal(jax.random.PRNGKey(1), (3, 5, 7), dtype=jnp.bfloat16)
    y3 = nonlin_rem_forward_copy(x3)
    jax.block_until_ready(y3)
    assert y3.shape == x3.shape and y3.dtype == x3.dtype
    assert bool(jnp.all(y3 == x3))

    print("KERNEL_OK")
</pallas_src>

<mosaic_0001>
module attributes {stable_mosaic.version = 11 : i64} {
  func.func @_alias_noop_kernel(%arg0: memref<2x4x16x16xf32, #tpu.memory_space<any>>, %arg1: memref<2x4x16x16xf32, #tpu.memory_space<any>>, %arg2: memref<1xi32, #tpu.memory_space<smem>>) attributes {dimension_semantics = [], scalar_prefetch = 0 : i64, scratch_operands = 1 : i64, tpu.core_type = #tpu.core_type<tc>} {
    %c1_i32 = arith.constant 1 : i32
    %c0 = arith.constant 0 : index
    %0 = memref.load %arg2[%c0] : memref<1xi32, #tpu.memory_space<smem>>
    memref.store %c1_i32, %arg2[%c0] : memref<1xi32, #tpu.memory_space<smem>>
    return
  }
}

</mosaic_0001>

<llo_original>
// kernel: nonlin_rem_forward.1
$region0: #{nonlin_rem_forward.1}
  #allocation0 [shape = 'u32[]', space=smem, size = 0x4, offset = 0x4, fixed_abs, tag = 'smem constant byte address 0x4 - core index']
  #allocation1 [shape = 'u32[144,128]{1,0:T(1,128)}', space=vmem, size = 0x12000, scoped, tag = 'internal scratch']
  #allocation2 [shape = 's32[1]{0:T(128)}', space=smem, size = 0x200, scoped, tag = 'scratch operand']
  %s0 = inlined_call_operand.hbm [shape: f32[2,4,16,16], index: 0, kind: input, shape index: {}, may-alias: {0,1}]
  %s1 = inlined_call_operand.hbm [shape: f32[2,4,16,16], index: 1, kind: output, shape index: {}, may-alias: {0,1}]
  %s2 = sld [smem:[#allocation0]]
  $region2: #{nonlin_rem_forward.1} parent=0
    _
  %s4 = ssub.s32 1, %s2
  %s5 = scalar_select 0, %s4, %s2
  %s6 = scalar_lea.smem [#allocation2], 0
  %7 = sst [smem:[%s6]] 1

</llo_original>
